<compile_context>
chip_gen: v7x
topology: tpu7x:2x2x1
jax: 0.10.0
libtpu: 0.0.40
codegen_flags: <defaults>
</compile_context>

<pallas_src>
import math

import jax
import jax.numpy as jnp
from jax.experimental import pallas as pl
from jax.experimental.pallas import tpu as pltpu


def sglu_kernel(x_ref, w1_ref, b1_ref, w2_ref, b2_ref, w3_ref, b3_ref,
                o_ref, acc_ref):
    j = pl.program_id(1)

    @pl.when(j == 0)
    def _init():
        acc_ref[...] = jnp.zeros_like(acc_ref)

    # In-kernel activation cast to the weight/MXU dtype (avoids a standalone
    # HBM-roundtrip cast op in the wrapper; no-op on the exact f32 path).
    x = x_ref[...].astype(w1_ref.dtype)                       # (tm, d1)

    # Gate projections for this d2-chunk: f32 MXU accumulation, then f32 bias
    # add + gate on the VPU (v5e-safe).
    o1 = jnp.dot(x, w1_ref[...],
                 preferred_element_type=jnp.float32) + b1_ref[...]
    o2 = jnp.dot(x, w2_ref[...],
                 preferred_element_type=jnp.float32) + b2_ref[...]
    h = o1 * o2                                                # (tm, tn) f32

    # Accumulate this chunk's contribution of the output projection (d2 -> d1).
    acc_ref[...] += jnp.dot(h.astype(w3_ref.dtype), w3_ref[...],
                            preferred_element_type=jnp.float32)

    @pl.when(j == pl.num_programs(1) - 1)
    def _finalize():
        o_ref[...] = (acc_ref[...] + b3_ref[...]).astype(o_ref.dtype)


def sglu_pallas(x, w1, b1, w2, b2, w3, b3, *, tm=256, tn=512,
                vmem_limit_bytes=48 * 1024 * 1024):
    """SGLU forward.

    x:  (M, d1) activations (any float dtype; cast to the weight dtype
        in-kernel for the MXU).
    w1/w2: (d1, d2), w3: (d2, d1) -- already transposed so the kernel computes
        x @ W.  Pre-cast to bf16 once at parameter-init time for the fast path.
    b1/b2: (1, d2), b3: (1, d1).
    """
    M, d1 = x.shape
    d2 = w1.shape[1]
    out_dtype = x.dtype
    w_itemsize = jnp.dtype(w1.dtype).itemsize

    # Bias adds happen in f32 on the VPU (tiny arrays; negligible cast cost).
    b1f = b1.astype(jnp.float32)
    b2f = b2.astype(jnp.float32)
    b3f = b3.astype(jnp.float32)

    # Token tile: as large as fits, but split into >=2 tiles whenever possible
    # so the "parallel" axis can shard across v7x's two TensorCores.
    tm = min(tm, M)
    if M > 8 and pl.cdiv(M, tm) < 2:
        tm = min(M, max(8, ((((M + 1) // 2) + 7) // 8) * 8))

    # Gate-width (d2) tile: must evenly divide d2 so no garbage columns enter
    # the gate product / W3 accumulation; fall back to full width otherwise.
    tn = min(tn, d2)
    if d2 % tn != 0:
        tn = d2  # TODO(synk): pad d2 for configs where 2*n_embd has no 128-multiple divisor

    grid = (pl.cdiv(M, tm), d2 // tn)
    grid_m = grid[0]

    flops = 6 * M * d1 * d2        # 2*M*d1*d2 per gate matmul + 2*M*d2*d1
    bytes_accessed = (
        x.size * jnp.dtype(x.dtype).itemsize
        + grid_m * (w1.size + w2.size + w3.size) * w_itemsize   # weights re-streamed per m-tile
        + grid_m * (b1f.size + b2f.size + b3f.size) * 4
        + M * d1 * jnp.dtype(out_dtype).itemsize)

    return pl.pallas_call(
        sglu_kernel,
        out_shape=jax.ShapeDtypeStruct((M, d1), out_dtype),
        grid_spec=pltpu.PrefetchScalarGridSpec(
            num_scalar_prefetch=0,
            grid=grid,
            in_specs=[
                pl.BlockSpec((tm, d1), lambda i, j: (i, 0)),   # x tile (resident over j)
                pl.BlockSpec((d1, tn), lambda i, j: (0, j)),   # W1 chunk (pipelined over j)
                pl.BlockSpec((1, tn), lambda i, j: (0, j)),    # b1 chunk
                pl.BlockSpec((d1, tn), lambda i, j: (0, j)),   # W2 chunk
                pl.BlockSpec((1, tn), lambda i, j: (0, j)),    # b2 chunk
                pl.BlockSpec((tn, d1), lambda i, j: (j, 0)),   # W3 chunk
                pl.BlockSpec((1, d1), lambda i, j: (0, 0)),    # b3 (constant)
            ],
            out_specs=pl.BlockSpec((tm, d1), lambda i, j: (i, 0)),
            scratch_shapes=[pltpu.VMEM((tm, d1), jnp.float32)],
        ),
        compiler_params=pltpu.CompilerParams(
            dimension_semantics=("parallel", "arbitrary"),
            vmem_limit_bytes=vmem_limit_bytes),
        cost_estimate=pl.CostEstimate(
            flops=flops, transcendentals=0, bytes_accessed=bytes_accessed),
    )(x, w1, b1f, w2, b2f, w3, b3f)


def sglu_ref(x, w1, b1, w2, b2, w3, b3):
    o1 = x @ w1 + b1
    o2 = x @ w2 + b2
    return (o1 * o2) @ w3 + b3


if __name__ == "__main__":
    # config: n_embd = 128 (lane-dense output), bias = True  ->  d1=128, d2=256
    B, T, d1 = 2, 8, 128
    d2 = 2 * d1

    key = jax.random.PRNGKey(0)
    kx, k1, k2, k3, k4, k5, k6 = jax.random.split(key, 7)

    x = jax.random.normal(kx, (B, T, d1), dtype=jnp.float32)

    # Deterministic "Linear"-style init (uniform, fan_in scaled), stored as
    # (d_in, d_out) so the kernel computes x @ W directly.
    def lin_init(kw, kb, d_in, d_out):
        bound = 1.0 / math.sqrt(d_in)
        w = jax.random.uniform(kw, (d_in, d_out), jnp.float32, -bound, bound)
        b = jax.random.uniform(kb, (1, d_out), jnp.float32, -bound, bound)
        return w, b

    w1, b1 = lin_init(k1, k2, d1, d2)
    w2, b2 = lin_init(k3, k4, d1, d2)
    w3, b3 = lin_init(k5, k6, d2, d1)

    x2d = x.reshape(B * T, d1)
    ref = sglu_ref(x2d, w1, b1, w2, b2, w3, b3).reshape(B, T, d1)

    # Exact-precision path (f32 weights, f32 activations): tight tolerance.
    out_f32 = sglu_pallas(x2d, w1, b1, w2, b2, w3, b3).reshape(B, T, d1)
    jax.block_until_ready(out_f32)
    assert out_f32.shape == (B, T, d1)
    assert jnp.allclose(out_f32, ref, atol=1e-5, rtol=1e-5)

    # Fast path: weights pre-cast ONCE to bf16 ("parameter-init-time" cast);
    # activations stay f32 and are cast to bf16 inside the kernel.
    w1b, w2b, w3b = (w1.astype(jnp.bfloat16), w2.astype(jnp.bfloat16),
                     w3.astype(jnp.bfloat16))
    out_bf16 = sglu_pallas(x2d, w1b, b1, w2b, b2, w3b, b3).reshape(B, T, d1)
    jax.block_until_ready(out_bf16)
    assert out_bf16.shape == (B, T, d1)
    assert jnp.allclose(out_bf16, ref, atol=7e-2, rtol=7e-2)

    # Partial last token tile (M not a multiple of tm): OOB output rows must
    # be dropped and valid rows unaffected.
    M_odd = 300
    x_odd = jax.random.normal(kx, (M_odd, d1), dtype=jnp.float32)
    ref_odd = sglu_ref(x_odd, w1, b1, w2, b2, w3, b3)
    out_odd = sglu_pallas(x_odd, w1, b1, w2, b2, w3, b3, tm=256)
    jax.block_until_ready(out_odd)
    assert out_odd.shape == (M_odd, d1)
    assert jnp.allclose(out_odd, ref_odd, atol=1e-5, rtol=1e-5)

    print("KERNEL_OK")
</pallas_src>

<mosaic_0001>
module attributes {stable_mosaic.version = 11 : i64} {
  func.func @sglu_kernel(%arg0: i32, %arg1: i32, %arg2: memref<8x128xf32, #tpu.memory_space<vmem>>, %arg3: memref<128x256xf32, #tpu.memory_space<vmem>>, %arg4: memref<1x256xf32, #tpu.memory_space<vmem>>, %arg5: memref<128x256xf32, #tpu.memory_space<vmem>>, %arg6: memref<1x256xf32, #tpu.memory_space<vmem>>, %arg7: memref<256x128xf32, #tpu.memory_space<vmem>>, %arg8: memref<1x128xf32, #tpu.memory_space<vmem>>, %arg9: memref<8x128xf32, #tpu.memory_space<vmem>>, %arg10: memref<8x128xf32, #tpu.memory_space<vmem>>) attributes {dimension_semantics = [#tpu.dimension_semantics<parallel>, #tpu.dimension_semantics<arbitrary>], iteration_bounds = array<i64: 2, 1>, scalar_prefetch = 0 : i64, scratch_operands = 1 : i64, tpu.core_type = #tpu.core_type<tc>, window_params = [{transform_indices = @transform_0, window_bounds = array<i64: 8, 128>}, {transform_indices = @transform_1, window_bounds = array<i64: 128, 256>}, {transform_indices = @transform_2, window_bounds = array<i64: 1, 256>}, {transform_indices = @transform_3, window_bounds = array<i64: 128, 256>}, {transform_indices = @transform_4, window_bounds = array<i64: 1, 256>}, {transform_indices = @transform_5, window_bounds = array<i64: 256, 128>}, {pipeline_mode = #tpu.pipeline_mode<synchronous>, transform_indices = @transform_6, window_bounds = array<i64: 1, 128>}, {transform_indices = @transform_7, window_bounds = array<i64: 8, 128>}]} {
    %c0_i32 = arith.constant 0 : i32
    %0 = arith.cmpi eq, %arg1, %c0_i32 : i32
    %1 = arith.extui %0 : i1 to i32
    %c0_i32_0 = arith.constant 0 : i32
    %2 = arith.cmpi ne, %1, %c0_i32_0 : i32
    scf.if %2 {
      %cst_20 = arith.constant 0.000000e+00 : f32
      %23 = vector.broadcast %cst_20 : f32 to vector<8x128xf32>
      %c0_21 = arith.constant 0 : index
      %c0_22 = arith.constant 0 : index
      %24 = vector.load %arg10[%c0_21, %c0_22] : memref<8x128xf32, #tpu.memory_space<vmem>>, vector<8x128xf32>
      tpu.vector_store %arg10[%c0_21, %c0_22], %23 {strides = array<i32>} : memref<8x128xf32, #tpu.memory_space<vmem>>, vector<8x128xf32>,
    } else {
    }
    %c0 = arith.constant 0 : index
    %c0_1 = arith.constant 0 : index
    %3 = vector.load %arg2[%c0, %c0_1] : memref<8x128xf32, #tpu.memory_space<vmem>>, vector<8x128xf32>
    %c0_2 = arith.constant 0 : index
    %c0_3 = arith.constant 0 : index
    %4 = vector.load %arg3[%c0_2, %c0_3] : memref<128x256xf32, #tpu.memory_space<vmem>>, vector<128x256xf32>
    %cst = arith.constant dense<0.000000e+00> : vector<8x256xf32>
    %5 = tpu.matmul %3, %4, %cst {dimension_numbers = #tpu.dot_dimension_numbers<[1], [0], [0], [1], [0, 0, 1, 1], [], []>} : vector<8x128xf32>, vector<128x256xf32>, vector<8x256xf32> -> vector<8x256xf32>
    %c0_4 = arith.constant 0 : index
    %c0_5 = arith.constant 0 : index
    %6 = vector.load %arg4[%c0_4, %c0_5] : memref<1x256xf32, #tpu.memory_space<vmem>>, vector<1x256xf32>
    %7 = vector.broadcast %6 : vector<1x256xf32> to vector<8x256xf32>
    %8 = arith.addf %5, %7 : vector<8x256xf32>
    %c0_6 = arith.constant 0 : index
    %c0_7 = arith.constant 0 : index
    %9 = vector.load %arg5[%c0_6, %c0_7] : memref<128x256xf32, #tpu.memory_space<vmem>>, vector<128x256xf32>
    %cst_8 = arith.constant dense<0.000000e+00> : vector<8x256xf32>
    %10 = tpu.matmul %3, %9, %cst_8 {dimension_numbers = #tpu.dot_dimension_numbers<[1], [0], [0], [1], [0, 0, 1, 1], [], []>} : vector<8x128xf32>, vector<128x256xf32>, vector<8x256xf32> -> vector<8x256xf32>
    %c0_9 = arith.constant 0 : index
    %c0_10 = arith.constant 0 : index
    %11 = vector.load %arg6[%c0_9, %c0_10] : memref<1x256xf32, #tpu.memory_space<vmem>>, vector<1x256xf32>
    %12 = vector.broadcast %11 : vector<1x256xf32> to vector<8x256xf32>
    %13 = arith.addf %10, %12 : vector<8x256xf32>
    %14 = arith.mulf %8, %13 : vector<8x256xf32>
    %c0_11 = arith.constant 0 : index
    %c0_12 = arith.constant 0 : index
    %15 = vector.load %arg10[%c0_11, %c0_12] : memref<8x128xf32, #tpu.memory_space<vmem>>, vector<8x128xf32>
    %c0_13 = arith.constant 0 : index
    %c0_14 = arith.constant 0 : index
    %16 = vector.load %arg7[%c0_13, %c0_14] : memref<256x128xf32, #tpu.memory_space<vmem>>, vector<256x128xf32>
    %cst_15 = arith.constant dense<0.000000e+00> : vector<8x128xf32>
    %17 = tpu.matmul %14, %16, %cst_15 {dimension_numbers = #tpu.dot_dimension_numbers<[1], [0], [0], [1], [0, 0, 1, 1], [], []>} : vector<8x256xf32>, vector<256x128xf32>, vector<8x128xf32> -> vector<8x128xf32>
    %18 = arith.addf %15, %17 : vector<8x128xf32>
    %c0_16 = arith.constant 0 : index
    %c0_17 = arith.constant 0 : index
    %19 = vector.load %arg10[%c0_16, %c0_17] : memref<8x128xf32, #tpu.memory_space<vmem>>, vector<8x128xf32>
    tpu.vector_store %arg10[%c0_16, %c0_17], %18 {strides = array<i32>} : memref<8x128xf32, #tpu.memory_space<vmem>>, vector<8x128xf32>,
    %c0_i32_18 = arith.constant 0 : i32
    %20 = arith.cmpi eq, %arg1, %c0_i32_18 : i32
    %21 = arith.extui %20 : i1 to i32
    %c0_i32_19 = arith.constant 0 : i32
    %22 = arith.cmpi ne, %21, %c0_i32_19 : i32
    scf.if %22 {
      %c0_20 = arith.constant 0 : index
      %c0_21 = arith.constant 0 : index
      %23 = vector.load %arg10[%c0_20, %c0_21] : memref<8x128xf32, #tpu.memory_space<vmem>>, vector<8x128xf32>
      %c0_22 = arith.constant 0 : index
      %c0_23 = arith.constant 0 : index
      %24 = vector.load %arg8[%c0_22, %c0_23] : memref<1x128xf32, #tpu.memory_space<vmem>>, vector<1x128xf32>
      %25 = vector.broadcast %24 : vector<1x128xf32> to vector<8x128xf32>
      %26 = arith.addf %23, %25 : vector<8x128xf32>
      %c0_24 = arith.constant 0 : index
      %c0_25 = arith.constant 0 : index
      %27 = vector.load %arg9[%c0_24, %c0_25] : memref<8x128xf32, #tpu.memory_space<vmem>>, vector<8x128xf32>
      tpu.vector_store %arg9[%c0_24, %c0_25], %26 {strides = array<i32>} : memref<8x128xf32, #tpu.memory_space<vmem>>, vector<8x128xf32>,
    } else {
    }
    return
  }
  func.func @transform_0(%arg0: i32, %arg1: i32) -> (i32, i32) {
    %c0_i32 = arith.constant 0 : i32
    %c0_i32_0 = arith.constant 0 : i32
    return %arg0, %c0_i32 : i32, i32
  }
  func.func @transform_1(%arg0: i32, %arg1: i32) -> (i32, i32) {
    %c0_i32 = arith.constant 0 : i32
    %c0_i32_0 = arith.constant 0 : i32
    return %c0_i32, %arg1 : i32, i32
  }
  func.func @transform_2(%arg0: i32, %arg1: i32) -> (i32, i32) {
    %c0_i32 = arith.constant 0 : i32
    %c0_i32_0 = arith.constant 0 : i32
    return %c0_i32, %arg1 : i32, i32
  }
  func.func @transform_3(%arg0: i32, %arg1: i32) -> (i32, i32) {
    %c0_i32 = arith.constant 0 : i32
    %c0_i32_0 = arith.constant 0 : i32
    return %c0_i32, %arg1 : i32, i32
  }
  func.func @transform_4(%arg0: i32, %arg1: i32) -> (i32, i32) {
    %c0_i32 = arith.constant 0 : i32
    %c0_i32_0 = arith.constant 0 : i32
    return %c0_i32, %arg1 : i32, i32
  }
  func.func @transform_5(%arg0: i32, %arg1: i32) -> (i32, i32) {
    %c0_i32 = arith.constant 0 : i32
    %c0_i32_0 = arith.constant 0 : i32
    return %arg1, %c0_i32 : i32, i32
  }
  func.func @transform_6(%arg0: i32, %arg1: i32) -> (i32, i32) {
    %c0_i32 = arith.constant 0 : i32
    %c0_i32_0 = arith.constant 0 : i32
    %c0_i32_1 = arith.constant 0 : i32
    return %c0_i32, %c0_i32_0 : i32, i32
  }
  func.func @transform_7(%arg0: i32, %arg1: i32) -> (i32, i32) {
    %c0_i32 = arith.constant 0 : i32
    %c0_i32_0 = arith.constant 0 : i32
    return %arg0, %c0_i32 : i32, i32
  }
}

</mosaic_0001>

<llo_original>
// kernel: tpu_custom_call.1
$region0: #{tpu_custom_call.1}
  #allocation0 [shape = 'u32[]', space=smem, size = 0x4, offset = 0x4, fixed_abs, tag = 'smem constant byte address 0x4 - core index']
  #allocation1 [shape = 'u32[144,128]{1,0:T(1,128)}', space=vmem, size = 0x12000, scoped, tag = 'internal scratch']
  #allocation2 [shape = 'f32[8,128]{1,0:T(8,128)}', space=vmem, size = 0x1000, scoped, tag = 'scratch operand']
  %s0 = inlined_call_operand.hbm [shape: f32[16,128], index: 0, kind: input, shape index: {}]
  %s1 = inlined_call_operand.hbm [shape: f32[128,256], index: 1, kind: input, shape index: {}]
  %s2 = inlined_call_operand.vmem [shape: f32[1,256], index: 2, kind: input, shape index: {}]
  %s3 = inlined_call_operand.hbm [shape: f32[128,256], index: 3, kind: input, shape index: {}]
  %s4 = inlined_call_operand.vmem [shape: f32[1,256], index: 4, kind: input, shape index: {}]
  %s5 = inlined_call_operand.hbm [shape: f32[256,128], index: 5, kind: input, shape index: {}]
  %s6 = inlined_call_operand.vmem [shape: f32[1,128], index: 6, kind: input, shape index: {}]
  %s7 = inlined_call_operand.hbm [shape: f32[16,128], index: 7, kind: output, shape index: {}]
  %s8 = sld [smem:[#allocation0]]
  $region85: #{tpu_custom_call.1} parent=0
    _
  %s10 = ssub.s32 1, %s8
  %s11 = scalar_select 0, %s10, %s8
  $region1: #{tpu_custom_call.1} parent=0
    #allocation3 [shape = 'u8[8192]{0}', space=vmem, size = 0x2000, scoped, tag = 'input window, operand 0']
    #allocation4 [shape = 's32[2]{0}', space=sflag, size = 0x8, scoped, tag = 'scoped memory for tpu_custom_call.1']
    #allocation5 [shape = 's32[2]{0}', space=sflag, size = 0x8, scoped, tag = 'scoped memory for tpu_custom_call.1']
    #allocation6 [shape = 'u8[131072]{0}', space=vmem, size = 0x20000, scoped, tag = 'input window, operand 1, single buffered']
    #allocation7 [shape = 's32[1]{0}', space=sflag, size = 0x4, scoped, tag = 'scoped memory for tpu_custom_call.1']
    #allocation8 [shape = 'u8[131072]{0}', space=vmem, size = 0x20000, scoped, tag = 'input window, operand 3, single buffered']
    #allocation9 [shape = 'u8[131072]{0}', space=vmem, size = 0x20000, scoped, tag = 'input window, operand 5, single buffered']
    #allocation10 [shape = 's32[1]{0}', space=sflag, size = 0x4, scoped, tag = 'scoped memory for tpu_custom_call.1']
    #allocation11 [shape = 'u8[8192]{0}', space=vmem, size = 0x2000, scoped, tag = 'output window, operand 0']
    %12 = vsyncpa [#allocation4], 0
    %s13 = scalar_lea.sflag [#allocation4], 1
    %14 = vsyncpa %s13, 0
    %15 = vsyncpa [#allocation7], 0
    %16 = vsyncpa [#allocation10], 0
    %17 = vsyncpa [#allocation5], 0
    %s18 = scalar_lea.sflag [#allocation5], 1
    %19 = vsyncpa %s18, 0
    loop: start=0, step=1, limit=4
    $region2: #{tpu_custom_call.1} parent=1 // loop_pre_header
      _
    $region3: #{tpu_custom_call.1} parent=1 // loop_header
      %s21 = sphi 0, %s25
      %p22 = scmp.ge.s32.totalorder %s21, 4
      %s28 = sphi 0, %s40
      %s29 = sphi 0, %s36
      %s30 = sphi 0, %s28
      %s31 = sphi 0, %s29
      %s32 = sphi 0, %s30
      %s33 = sphi 0, %s31
      %s43 = sphi 0, %s45
      %s46 = sphi 0, %s43
      %s47 = sphi 0, %s46
      %s63 = sphi 0, %s47
      %s69 = sphi 0, %s71
      %s72 = sphi 0, %s69
      %s73 = sphi 0, %s72
      %s89 = sphi 0, %s73
      %s95 = sphi 0, %s97
      %s98 = sphi 0, %s95
      %s99 = sphi 0, %s98
      %s115 = sphi 0, %s99
      %s121 = sphi 0, %s123
      %s124 = sphi 0, %s121
      %s125 = sphi 0, %s124
      %s141 = sphi 0, %s125
      %s147 = sphi 0, %s149
      %s150 = sphi 0, %s147
      %s151 = sphi 0, %s150
      %s167 = sphi 0, %s151
      %s173 = sphi 0, %s175
      %s176 = sphi 0, %s173
      %s177 = sphi 0, %s176
      %s193 = sphi 0, %s177
      %s197 = sphi 0, %s197
      %s199 = sphi 0, %s197
      %s200 = sphi 0, %s199
      %s214 = sphi 0, %s200
      %s220 = sphi 0, %s222
      %s223 = sphi 0, %s220
      %s224 = sphi 0, %s223
      %s240 = sphi 0, %s224
    $region4: #{tpu_custom_call.1} parent=1 // loop_header_branch
      %24 = sbr.rel (%p22) target = $region8
    $region5: #{tpu_custom_call.1} parent=1 // loop_body
      %s26 = ssub.s32 %s21, 1
      %s27 = ssub.s32 %s21, 2
      %s34 = sadd.s32 1, %s29
      %p35 = scmp.ge.s32.totalorder %s34, 1
      %s36 = scalar_select %p35, 0, %s34
      %s37 = sadd.s32 1, %s28
      %s38 = scalar_select %p35, %s37, %s28
      %p39 = scmp.ge.s32.totalorder %s38, 2
      %s40 = scalar_select %p39, 0, %s38
      %s41 = ssub.s32 %s28, %s40
      %p42 = scmp.eq.s32.totalorder %s41, 0
      %s44 = sadd.s32 %s43, 1
      %s45 = scalar_select %p42, %s43, %s44
      %p48 = pneg %p42
      %p49 = scmp.eq.s32.totalorder %s21, 1
      %p50 = por %p48, %p49
      %p51 = scmp.ne.s32.totalorder %s43, %s46
      %p52 = scmp.eq.s32.totalorder %s21, 0
      %p53 = por %p51, %p52
      %p54 = scmp.ne.s32.totalorder %s43, %s46
      %p55 = scmp.eq.s32.totalorder %s26, 1
      %p56 = por %p54, %p55
      %p57 = scmp.ne.s32.totalorder %s46, %s47
      %p58 = scmp.eq.s32.totalorder %s26, 0
      %p59 = por %p57, %p58
      %p60 = scmp.ne.s32.totalorder %s46, %s47
      %p61 = scmp.eq.s32.totalorder %s27, 1
      %p62 = por %p60, %p61
      %p64 = scmp.ne.s32.totalorder %s47, %s63
      %p65 = scmp.eq.s32.totalorder %s27, 0
      %p66 = por %p64, %p65
      %s67 = ssub.s32 %s29, %s36
      %p68 = scmp.eq.s32.totalorder %s67, 0
      %s70 = sadd.s32 %s69, 1
      %s71 = scalar_select %p68, %s69, %s70
      %p74 = pneg %p68
      %p75 = scmp.eq.s32.totalorder %s21, 1
      %p76 = por %p74, %p75
      %p77 = scmp.ne.s32.totalorder %s69, %s72
      %p78 = scmp.eq.s32.totalorder %s21, 0
      %p79 = por %p77, %p78
      %p80 = scmp.ne.s32.totalorder %s69, %s72
      %p81 = scmp.eq.s32.totalorder %s26, 1
      %p82 = por %p80, %p81
      %p83 = scmp.ne.s32.totalorder %s72, %s73
      %p84 = scmp.eq.s32.totalorder %s26, 0
      %p85 = por %p83, %p84
      %p86 = scmp.ne.s32.totalorder %s72, %s73
      %p87 = scmp.eq.s32.totalorder %s27, 1
      %p88 = por %p86, %p87
      %p90 = scmp.ne.s32.totalorder %s73, %s89
      %p91 = scmp.eq.s32.totalorder %s27, 0
      %p92 = por %p90, %p91
      %s93 = ssub.s32 %s29, %s36
      %p94 = scmp.eq.s32.totalorder %s93, 0
      %s96 = sadd.s32 %s95, 1
      %s97 = scalar_select %p94, %s95, %s96
      %p100 = pneg %p94
      %p101 = scmp.eq.s32.totalorder %s21, 1
      %p102 = por %p100, %p101
      %p103 = scmp.ne.s32.totalorder %s95, %s98
      %p104 = scmp.eq.s32.totalorder %s21, 0
      %p105 = por %p103, %p104
      %p106 = scmp.ne.s32.totalorder %s95, %s98
      %p107 = scmp.eq.s32.totalorder %s26, 1
      %p108 = por %p106, %p107
      %p109 = scmp.ne.s32.totalorder %s98, %s99
      %p110 = scmp.eq.s32.totalorder %s26, 0
      %p111 = por %p109, %p110
      %p112 = scmp.ne.s32.totalorder %s98, %s99
      %p113 = scmp.eq.s32.totalorder %s27, 1
      %p114 = por %p112, %p113
      %p116 = scmp.ne.s32.totalorder %s99, %s115
      %p117 = scmp.eq.s32.totalorder %s27, 0
      %p118 = por %p116, %p117
      %s119 = ssub.s32 %s29, %s36
      %p120 = scmp.eq.s32.totalorder %s119, 0
      %s122 = sadd.s32 %s121, 1
      %s123 = scalar_select %p120, %s121, %s122
      %p126 = pneg %p120
      %p127 = scmp.eq.s32.totalorder %s21, 1
      %p128 = por %p126, %p127
      %p129 = scmp.ne.s32.totalorder %s121, %s124
      %p130 = scmp.eq.s32.totalorder %s21, 0
      %p131 = por %p129, %p130
      %p132 = scmp.ne.s32.totalorder %s121, %s124
      %p133 = scmp.eq.s32.totalorder %s26, 1
      %p134 = por %p132, %p133
      %p135 = scmp.ne.s32.totalorder %s124, %s125
      %p136 = scmp.eq.s32.totalorder %s26, 0
      %p137 = por %p135, %p136
      %p138 = scmp.ne.s32.totalorder %s124, %s125
      %p139 = scmp.eq.s32.totalorder %s27, 1
      %p140 = por %p138, %p139
      %p142 = scmp.ne.s32.totalorder %s125, %s141
      %p143 = scmp.eq.s32.totalorder %s27, 0
      %p144 = por %p142, %p143
      %s145 = ssub.s32 %s29, %s36
      %p146 = scmp.eq.s32.totalorder %s145, 0
      %s148 = sadd.s32 %s147, 1
      %s149 = scalar_select %p146, %s147, %s148
      %p152 = pneg %p146
      %p153 = scmp.eq.s32.totalorder %s21, 1
      %p154 = por %p152, %p153
      %p155 = scmp.ne.s32.totalorder %s147, %s150
      %p156 = scmp.eq.s32.totalorder %s21, 0
      %p157 = por %p155, %p156
      %p158 = scmp.ne.s32.totalorder %s147, %s150
      %p159 = scmp.eq.s32.totalorder %s26, 1
      %p160 = por %p158, %p159
      %p161 = scmp.ne.s32.totalorder %s150, %s151
      %p162 = scmp.eq.s32.totalorder %s26, 0
      %p163 = por %p161, %p162
      %p164 = scmp.ne.s32.totalorder %s150, %s151
      %p165 = scmp.eq.s32.totalorder %s27, 1
      %p166 = por %p164, %p165
      %p168 = scmp.ne.s32.totalorder %s151, %s167
      %p169 = scmp.eq.s32.totalorder %s27, 0
      %p170 = por %p168, %p169
      %s171 = ssub.s32 %s29, %s36
      %p172 = scmp.eq.s32.totalorder %s171, 0
      %s174 = sadd.s32 %s173, 1
      %s175 = scalar_select %p172, %s173, %s174
      %p178 = pneg %p172
      %p179 = scmp.eq.s32.totalorder %s21, 1
      %p180 = por %p178, %p179
      %p181 = scmp.ne.s32.totalorder %s173, %s176
      %p182 = scmp.eq.s32.totalorder %s21, 0
      %p183 = por %p181, %p182
      %p184 = scmp.ne.s32.totalorder %s173, %s176
      %p185 = scmp.eq.s32.totalorder %s26, 1
      %p186 = por %p184, %p185
      %p187 = scmp.ne.s32.totalorder %s176, %s177
      %p188 = scmp.eq.s32.totalorder %s26, 0
      %p189 = por %p187, %p188
      %p190 = scmp.ne.s32.totalorder %s176, %s177
      %p191 = scmp.eq.s32.totalorder %s27, 1
      %p192 = por %p190, %p191
      %p194 = scmp.ne.s32.totalorder %s177, %s193
      %p195 = scmp.eq.s32.totalorder %s27, 0
      %p196 = por %p194, %p195
      %s198 = sadd.s32 %s197, 1
      %p201 = scmp.eq.s32.totalorder %s21, 1
      %p202 = scmp.ne.s32.totalorder %s197, %s199
      %p203 = scmp.eq.s32.totalorder %s21, 0
      %p204 = por %p202, %p203
      %p205 = scmp.ne.s32.totalorder %s197, %s199
      %p206 = scmp.eq.s32.totalorder %s26, 1
      %p207 = por %p205, %p206
      %p208 = scmp.ne.s32.totalorder %s199, %s200
      %p209 = scmp.eq.s32.totalorder %s26, 0
      %p210 = por %p208, %p209
      %p211 = scmp.ne.s32.totalorder %s199, %s200
      %p212 = scmp.eq.s32.totalorder %s27, 1
      %p213 = por %p211, %p212
      %p215 = scmp.ne.s32.totalorder %s200, %s214
      %p216 = scmp.eq.s32.totalorder %s27, 0
      %p217 = por %p215, %p216
      %s218 = ssub.s32 %s28, %s40
      %p219 = scmp.eq.s32.totalorder %s218, 0
      %s221 = sadd.s32 %s220, 1
      %s222 = scalar_select %p219, %s220, %s221
      %p225 = pneg %p219
      %p226 = scmp.eq.s32.totalorder %s21, 1
      %p227 = por %p225, %p226
      %p228 = scmp.ne.s32.totalorder %s220, %s223
      %p229 = scmp.eq.s32.totalorder %s21, 0
      %p230 = por %p228, %p229
      %p231 = scmp.ne.s32.totalorder %s220, %s223
      %p232 = scmp.eq.s32.totalorder %s26, 1
      %p233 = por %p231, %p232
      %p234 = scmp.ne.s32.totalorder %s223, %s224
      %p235 = scmp.eq.s32.totalorder %s26, 0
      %p236 = por %p234, %p235
      %p237 = scmp.ne.s32.totalorder %s223, %s224
      %p238 = scmp.eq.s32.totalorder %s27, 1
      %p239 = por %p237, %p238
      %p241 = scmp.ne.s32.totalorder %s224, %s240
      %p242 = scmp.eq.s32.totalorder %s27, 0
      %p243 = por %p241, %p242
      %p244 = scmp.le.s32.totalorder 1, %s21
      %p245 = scmp.lt.s32.totalorder %s21, 3
      %p246 = pnand %p244, %p245
      %p247 = pneg %p246
      // Predicated region
      $region9: #{tpu_custom_call.1} parent=5 // pred_check
        _
      $region10: #{tpu_custom_call.1} parent=5 // pred_check_branch
        %249 = sbr.rel (%p246) target = $region12
      $region11: #{tpu_custom_call.1} parent=5 // pred_region
        %s250 = ssub.s32 %s21, 1
        // Predicated region
        $region13: #{tpu_custom_call.1} parent=11 // pred_check
          %p251 = pneg %p85
        $region14: #{tpu_custom_call.1} parent=11 // pred_check_branch
          %253 = sbr.rel (%p251) target = $region16
        $region15: #{tpu_custom_call.1} parent=11 // pred_region
          %s254 = smul.u32 2, %s31
          %s256 = ssub.s32 4096, 4096
          %257 = vsyncadd [#allocation7], %s256
          %s258 = smul.addr %s254, 128
          %s259 = scalar_lea.hbm %s1, %s258
          %s260 = sshll.u32 [#allocation6], 4
          %s261 = int_to_ptr.vmem [resolvable:$true] %s260
          %266 = dma.hbm_to_vmem [thread:$0]  %s259, 4096, %s261, [#allocation7], 256, 256, 16
        $region16: #{tpu_custom_call.1} parent=11 // pred_fallthru
          _
        // Predicated region
        $region17: #{tpu_custom_call.1} parent=11 // pred_check
          %p267 = pneg %p111
        $region18: #{tpu_custom_call.1} parent=11 // pred_check_branch
          %269 = sbr.rel (%p267) target = $region20
        $region19: #{tpu_custom_call.1} parent=11 // pred_region
          %s270 = smul.u32 2, %s31
          %p271 = scmp.lt.s32.totalorder %s270, 1
          %s272 = scalar_select %p271, %s270, 1
          %s273 = scalar_lea.vmem %s2, %s272
          %s274 = smul.u32 2, %s31
        $region20: #{tpu_custom_call.1} parent=11 // pred_fallthru
          _
        // Predicated region
        $region21: #{tpu_custom_call.1} parent=11 // pred_check
          %p275 = pneg %p137
        $region22: #{tpu_custom_call.1} parent=11 // pred_check_branch
          %277 = sbr.rel (%p275) target = $region24
        $region23: #{tpu_custom_call.1} parent=11 // pred_region
          %s278 = smul.u32 2, %s31
          %s280 = ssub.s32 4096, 4096
          %281 = vsyncadd [#allocation7], %s280
          %s282 = smul.addr %s278, 128
          %s283 = scalar_lea.hbm %s3, %s282
          %s284 = sshll.u32 [#allocation8], 4
          %s285 = int_to_ptr.vmem [resolvable:$true] %s284
          %290 = dma.hbm_to_vmem [thread:$0]  %s283, 4096, %s285, [#allocation7], 256, 256, 16
        $region24: #{tpu_custom_call.1} parent=11 // pred_fallthru
          _
        // Predicated region
        $region25: #{tpu_custom_call.1} parent=11 // pred_check
          %p291 = pneg %p163
        $region26: #{tpu_custom_call.1} parent=11 // pred_check_branch
          %293 = sbr.rel (%p291) target = $region28
        $region27: #{tpu_custom_call.1} parent=11 // pred_region
          %s294 = smul.u32 2, %s31
          %p295 = scmp.lt.s32.totalorder %s294, 1
          %s296 = scalar_select %p295, %s294, 1
          %s297 = scalar_lea.vmem %s4, %s296
          %s298 = smul.u32 2, %s31
        $region28: #{tpu_custom_call.1} parent=11 // pred_fallthru
          _
        // Predicated region
        $region29: #{tpu_custom_call.1} parent=11 // pred_check
          %p299 = pneg %p189
        $region30: #{tpu_custom_call.1} parent=11 // pred_check_branch
          %301 = sbr.rel (%p299) target = $region32
        $region31: #{tpu_custom_call.1} parent=11 // pred_region
          %s302 = smul.u32 32, %s31
          %s304 = ssub.s32 4096, 4096
          %305 = vsyncadd [#allocation10], %s304
          %s306 = smul.addr %s302, 128
          %s307 = scalar_lea.hbm %s5, %s306
          %s308 = sshll.u32 [#allocation9], 4
          %s309 = int_to_ptr.vmem [resolvable:$true] %s308
          %314 = dma.hbm_to_vmem [thread:$0]  %s307, 4096, %s309, [#allocation10], 128, 128, 8
        $region32: #{tpu_custom_call.1} parent=11 // pred_fallthru
          _
        // Predicated region
        $region33: #{tpu_custom_call.1} parent=11 // pred_check
          %p315 = pneg %p210
        $region34: #{tpu_custom_call.1} parent=11 // pred_check_branch
          %317 = sbr.rel (%p315) target = $region36
        $region35: #{tpu_custom_call.1} parent=11 // pred_region
          _
        $region36: #{tpu_custom_call.1} parent=11 // pred_fallthru
          _
      $region12: #{tpu_custom_call.1} parent=5 // pred_fallthru
        _
      %p318 = scmp.lt.s32.totalorder %s21, 2
      // Predicated region
      $region37: #{tpu_custom_call.1} parent=5 // pred_check
        %p319 = pneg %p318
      $region38: #{tpu_custom_call.1} parent=5 // pred_check_branch
        %321 = sbr.rel (%p319) target = $region40
      $region39: #{tpu_custom_call.1} parent=5 // pred_region
        // Predicated region
        $region41: #{tpu_custom_call.1} parent=39 // pred_check
          %p322 = pneg %p53
        $region42: #{tpu_custom_call.1} parent=39 // pred_check_branch
          %324 = sbr.rel (%p322) target = $region44
        $region43: #{tpu_custom_call.1} parent=39 // pred_region
          %s325 = sand.u32 %s43, 1
          %s326 = scalar_lea.sflag [#allocation4], %s325
          %s327 = sand.u32 %s43, 1
          %s328 = smul.addr %s327, 8
          %s329 = scalar_lea.vmem [#allocation3], %s328
          %s331 = ssub.s32 128, 128
          %332 = vsyncadd %s326, %s331
          %s333 = smul.addr %s28, 128
          %s334 = scalar_lea.hbm %s0, %s333
          %s336 = sshll.u32 %s329, 4
          %s337 = int_to_ptr.vmem [resolvable:$true] %s336
          %339 = dma.hbm_to_vmem [thread:$0]  %s334, 128, %s337, %s326
        $region44: #{tpu_custom_call.1} parent=39 // pred_fallthru
          _
      $region40: #{tpu_custom_call.1} parent=5 // pred_fallthru
        _
      %p340 = scmp.le.s32.totalorder 1, %s21
      %p341 = scmp.lt.s32.totalorder %s21, 3
      %p342 = pnand %p340, %p341
      %p343 = pneg %p342
      // Predicated region
      $region45: #{tpu_custom_call.1} parent=5 // pred_check
        _
      $region46: #{tpu_custom_call.1} parent=5 // pred_check_branch
        %345 = sbr.rel (%p342) target = $region48
      $region47: #{tpu_custom_call.1} parent=5 // pred_region
        %s346 = ssub.s32 %s21, 1
        %s347 = sand.u32 %s46, 1
        %s348 = scalar_lea.sflag [#allocation4], %s347
        %s349 = sand.u32 %s46, 1
        %s350 = smul.addr %s349, 8
        %s351 = scalar_lea.vmem [#allocation3], %s350
        // Predicated region
        $region49: #{tpu_custom_call.1} parent=47 // pred_check
          %p352 = pneg %p59
        $region50: #{tpu_custom_call.1} parent=47 // pred_check_branch
          %354 = sbr.rel (%p352) target = $region52
        $region51: #{tpu_custom_call.1} parent=47 // pred_region
          %355 = dma.done %s348, 128
        $region52: #{tpu_custom_call.1} parent=47 // pred_fallthru
          _
        // Predicated region
        $region53: #{tpu_custom_call.1} parent=47 // pred_check
          %p356 = pneg %p85
        $region54: #{tpu_custom_call.1} parent=47 // pred_check_branch
          %358 = sbr.rel (%p356) target = $region56
        $region55: #{tpu_custom_call.1} parent=47 // pred_region
          %359 = dma.done [#allocation7], 4096
        $region56: #{tpu_custom_call.1} parent=47 // pred_fallthru
          _
        // Predicated region
        $region57: #{tpu_custom_call.1} parent=47 // pred_check
          %p360 = pneg %p137
        $region58: #{tpu_custom_call.1} parent=47 // pred_check_branch
          %362 = sbr.rel (%p360) target = $region60
        $region59: #{tpu_custom_call.1} parent=47 // pred_region
          %363 = dma.done [#allocation7], 4096
        $region60: #{tpu_custom_call.1} parent=47 // pred_fallthru
          _
        // Predicated region
        $region61: #{tpu_custom_call.1} parent=47 // pred_check
          %p364 = pneg %p189
        $region62: #{tpu_custom_call.1} parent=47 // pred_check_branch
          %366 = sbr.rel (%p364) target = $region64
        $region63: #{tpu_custom_call.1} parent=47 // pred_region
          %367 = dma.done [#allocation10], 4096
        $region64: #{tpu_custom_call.1} parent=47 // pred_fallthru
          _
        %s368 = sand.u32 %s46, 1
        %s369 = scalar_lea.sflag [#allocation4], %s368
        %s370 = sand.u32 %s46, 1
        %s371 = smul.addr %s370, 8
        %s372 = scalar_lea.vmem [#allocation3], %s371
        %p373 = pneg %p59
        %p374 = pneg %p56
        %p375 = pneg %p85
        %p376 = pneg %p82
        %s377 = smul.u32 2, %s31
        %p378 = scmp.lt.s32.totalorder %s377, 1
        %s379 = scalar_select %p378, %s377, 1
        %s380 = scalar_lea.vmem %s2, %s379
        %p381 = pneg %p111
        %p382 = pneg %p108
        %p383 = pneg %p137
        %p384 = pneg %p134
        %s385 = smul.u32 2, %s31
        %p386 = scmp.lt.s32.totalorder %s385, 1
        %s387 = scalar_select %p386, %s385, 1
        %s388 = scalar_lea.vmem %s4, %s387
        %p389 = pneg %p163
        %p390 = pneg %p160
        %p391 = pneg %p189
        %p392 = pneg %p186
        %p393 = pneg %p210
        %p394 = pneg %p207
        %p395 = pneg %p236
        %p396 = pneg %p233
        %s397 = sand.u32 %s223, 1
        %s398 = scalar_lea.sflag [#allocation5], %s397
        %s399 = sand.u32 %s223, 1
        %s400 = smul.addr %s399, 8
        %s401 = scalar_lea.vmem [#allocation11], %s400
        %s402 = smul.u32 2, %s31
        %s403 = smul.u32 2, %s31
        %p404 = scmp.lt.s32.totalorder %s403, 1
        %s405 = scalar_select %p404, %s403, 1
        %s406 = scalar_lea.vmem %s2, %s405
        %s407 = smul.u32 2, %s31
        %s408 = smul.u32 2, %s31
        %s409 = smul.u32 2, %s31
        %p410 = scmp.lt.s32.totalorder %s409, 1
        %s411 = scalar_select %p410, %s409, 1
        %s412 = scalar_lea.vmem %s4, %s411
        %s413 = smul.u32 2, %s31
        %s414 = smul.u32 32, %s31
        %p415 = scmp.eq.s32.totalorder %s31, 0
        // Predicated region
        $region65: #{tpu_custom_call.1} parent=47 // pred_check
          %p416 = pneg %p415
        $region66: #{tpu_custom_call.1} parent=47 // pred_check_branch
          %418 = sbr.rel (%p416) target = $region68
        $region67: #{tpu_custom_call.1} parent=47 // pred_region
          %419 = vst [vmem:[#allocation2] sm:$0xff] 0.0
        $region68: #{tpu_custom_call.1} parent=47 // pred_fallthru
          _
        %v420 = vld [vmem:[%s351] sm:$0xff]
        %v421 = vld [vmem:[#allocation6] sm:$0xff]
        %v422 = vld [vmem:[#allocation6 + $0x8] sm:$0xff]
        %v423 = vld [vmem:[#allocation6 + $0x10] sm:$0xff]
        %v424 = vld [vmem:[#allocation6 + $0x18] sm:$0xff]
        %v425 = vld [vmem:[#allocation6 + $0x20] sm:$0xff]
        %v426 = vld [vmem:[#allocation6 + $0x28] sm:$0xff]
        %v427 = vld [vmem:[#allocation6 + $0x30] sm:$0xff]
        %v428 = vld [vmem:[#allocation6 + $0x38] sm:$0xff]
        %v429 = vld [vmem:[#allocation6 + $0x40] sm:$0xff]
        %v430 = vld [vmem:[#allocation6 + $0x48] sm:$0xff]
        %v431 = vld [vmem:[#allocation6 + $0x50] sm:$0xff]
        %v432 = vld [vmem:[#allocation6 + $0x58] sm:$0xff]
        %v433 = vld [vmem:[#allocation6 + $0x60] sm:$0xff]
        %v434 = vld [vmem:[#allocation6 + $0x68] sm:$0xff]
        %v435 = vld [vmem:[#allocation6 + $0x70] sm:$0xff]
        %v436 = vld [vmem:[#allocation6 + $0x78] sm:$0xff]
        %v437 = vld [vmem:[#allocation6 + $0x80] sm:$0xff]
        %v438 = vld [vmem:[#allocation6 + $0x88] sm:$0xff]
        %v439 = vld [vmem:[#allocation6 + $0x90] sm:$0xff]
        %v440 = vld [vmem:[#allocation6 + $0x98] sm:$0xff]
        %v441 = vld [vmem:[#allocation6 + $0xa0] sm:$0xff]
        %v442 = vld [vmem:[#allocation6 + $0xa8] sm:$0xff]
        %v443 = vld [vmem:[#allocation6 + $0xb0] sm:$0xff]
        %v444 = vld [vmem:[#allocation6 + $0xb8] sm:$0xff]
        %v445 = vld [vmem:[#allocation6 + $0xc0] sm:$0xff]
        %v446 = vld [vmem:[#allocation6 + $0xc8] sm:$0xff]
        %v447 = vld [vmem:[#allocation6 + $0xd0] sm:$0xff]
        %v448 = vld [vmem:[#allocation6 + $0xd8] sm:$0xff]
        %v449 = vld [vmem:[#allocation6 + $0xe0] sm:$0xff]
        %v450 = vld [vmem:[#allocation6 + $0xe8] sm:$0xff]
        %v451 = vld [vmem:[#allocation6 + $0xf0] sm:$0xff]
        %v452 = vld [vmem:[#allocation6 + $0xf8] sm:$0xff]
        %v453 = vld [vmem:[%s406] sm:$0x3]
        %v455 = vlaneseq
        %v456 = vshrl.u32 %v455, 7
        %v457 = vsub.s32 0, %v456
        %v458 = vrot.slane %v453, %v457
        %v459 = vlaneseq
        %v460 = vshrl.u32 %v459, 7
        %v461 = vsub.s32 1, %v460
        %v462 = vrot.slane %v453, %v461
        %465 = vmatprep.subr.mxu0 %v422
        %466 = vmatpush1.msra.mxu0 %v421
        %467 = vmatprep.subr.mxu0 %v424
        %468 = vmatpush1.msra.mxu0 %v423
        %469 = vmatprep.subr.mxu0 %v426
        %470 = vmatpush1.msra.mxu0 %v425
        %471 = vmatprep.subr.mxu0 %v428
        %472 = vmatpush1.msra.mxu0 %v427
        %473 = vmatprep.subr.mxu0 %v430
        %474 = vmatpush1.msra.mxu0 %v429
        %475 = vmatprep.subr.mxu0 %v432
        %476 = vmatpush1.msra.mxu0 %v431
        %477 = vmatprep.subr.mxu0 %v434
        %478 = vmatpush1.msra.mxu0 %v433
        %479 = vmatprep.subr.mxu0 %v436
        %480 = vmatpush1.msra.mxu0 %v435
        %481 = vmatprep.subr.mxu0 %v438
        %482 = vmatpush1.msra.mxu0 %v437
        %483 = vmatprep.subr.mxu0 %v440
        %484 = vmatpush1.msra.mxu0 %v439
        %485 = vmatprep.subr.mxu0 %v442
        %486 = vmatpush1.msra.mxu0 %v441
        %487 = vmatprep.subr.mxu0 %v444
        %488 = vmatpush1.msra.mxu0 %v443
        %489 = vmatprep.subr.mxu0 %v446
        %490 = vmatpush1.msra.mxu0 %v445
        %491 = vmatprep.subr.mxu0 %v448
        %492 = vmatpush1.msra.mxu0 %v447
        %493 = vmatprep.subr.mxu0 %v450
        %494 = vmatpush1.msra.mxu0 %v449
        %495 = vmatprep.subr.mxu0 %v452
        %496 = vmatpush1.msra.mxu0 %v451
        %497 = vmatprep.subr.mxu0 0.0
        %498 = vmatpush1.msra.mxu0 0.0
        %499 = vmatprep.subr.mxu0 0.0
        %500 = vmatpush1.msra.mxu0 0.0
        %501 = vmatprep.subr.mxu0 0.0
        %502 = vmatpush1.msra.mxu0 0.0
        %503 = vmatprep.subr.mxu0 0.0
        %504 = vmatpush1.msra.mxu0 0.0
        %505 = vmatprep.subr.mxu0 0.0
        %506 = vmatpush1.msra.mxu0 0.0
        %507 = vmatprep.subr.mxu0 0.0
        %508 = vmatpush1.msra.mxu0 0.0
        %509 = vmatprep.subr.mxu0 0.0
        %510 = vmatpush1.msra.mxu0 0.0
        %511 = vmatprep.subr.mxu0 0.0
        %512 = vmatpush1.msra.mxu0 0.0
        %513 = vmatprep.subr.mxu0 0.0
        %514 = vmatpush1.msra.mxu0 0.0
        %515 = vmatprep.subr.mxu0 0.0
        %516 = vmatpush1.msra.mxu0 0.0
        %517 = vmatprep.subr.mxu0 0.0
        %518 = vmatpush1.msra.mxu0 0.0
        %519 = vmatprep.subr.mxu0 0.0
        %520 = vmatpush1.msra.mxu0 0.0
        %521 = vmatprep.subr.mxu0 0.0
        %522 = vmatpush1.msra.mxu0 0.0
        %523 = vmatprep.subr.mxu0 0.0
        %524 = vmatpush1.msra.mxu0 0.0
        %525 = vmatprep.subr.mxu0 0.0
        %526 = vmatpush1.msra.mxu0 0.0
        %527 = vmatprep.subr.mxu0 0.0
        %528 = vmatpush1.msra.mxu0 0.0
        %529 = vmatprep.mubr.f32.mxu0 0.0
        %530 = vmatmul.mubr.f32.gmra.mrb[0].mxu0 %v420
        %v531 = vpop.f32.mrb[0].mxu0
        %v532 = vadd.f32 %v458, %v531
        %v533 = vpop.f32.mrb[0].mxu0
        %v534 = vadd.f32 %v462, %v533
        %535 = vdwg.mxu0
        %v536 = vld [vmem:[#allocation8] sm:$0xff]
        %v537 = vld [vmem:[#allocation8 + $0x8] sm:$0xff]
        %v538 = vld [vmem:[#allocation8 + $0x10] sm:$0xff]
        %v539 = vld [vmem:[#allocation8 + $0x18] sm:$0xff]
        %v540 = vld [vmem:[#allocation8 + $0x20] sm:$0xff]
        %v541 = vld [vmem:[#allocation8 + $0x28] sm:$0xff]
        %v542 = vld [vmem:[#allocation8 + $0x30] sm:$0xff]
        %v543 = vld [vmem:[#allocation8 + $0x38] sm:$0xff]
        %v544 = vld [vmem:[#allocation8 + $0x40] sm:$0xff]
        %v545 = vld [vmem:[#allocation8 + $0x48] sm:$0xff]
        %v546 = vld [vmem:[#allocation8 + $0x50] sm:$0xff]
        %v547 = vld [vmem:[#allocation8 + $0x58] sm:$0xff]
        %v548 = vld [vmem:[#allocation8 + $0x60] sm:$0xff]
        %v549 = vld [vmem:[#allocation8 + $0x68] sm:$0xff]
        %v550 = vld [vmem:[#allocation8 + $0x70] sm:$0xff]
        %v551 = vld [vmem:[#allocation8 + $0x78] sm:$0xff]
        %v552 = vld [vmem:[#allocation8 + $0x80] sm:$0xff]
        %v553 = vld [vmem:[#allocation8 + $0x88] sm:$0xff]
        %v554 = vld [vmem:[#allocation8 + $0x90] sm:$0xff]
        %v555 = vld [vmem:[#allocation8 + $0x98] sm:$0xff]
        %v556 = vld [vmem:[#allocation8 + $0xa0] sm:$0xff]
        %v557 = vld [vmem:[#allocation8 + $0xa8] sm:$0xff]
        %v558 = vld [vmem:[#allocation8 + $0xb0] sm:$0xff]
        %v559 = vld [vmem:[#allocation8 + $0xb8] sm:$0xff]
        %v560 = vld [vmem:[#allocation8 + $0xc0] sm:$0xff]
        %v561 = vld [vmem:[#allocation8 + $0xc8] sm:$0xff]
        %v562 = vld [vmem:[#allocation8 + $0xd0] sm:$0xff]
        %v563 = vld [vmem:[#allocation8 + $0xd8] sm:$0xff]
        %v564 = vld [vmem:[#allocation8 + $0xe0] sm:$0xff]
        %v565 = vld [vmem:[#allocation8 + $0xe8] sm:$0xff]
        %v566 = vld [vmem:[#allocation8 + $0xf0] sm:$0xff]
        %v567 = vld [vmem:[#allocation8 + $0xf8] sm:$0xff]
        %v568 = vld [vmem:[%s412] sm:$0x3]
        %v570 = vlaneseq
        %v571 = vshrl.u32 %v570, 7
        %v572 = vsub.s32 0, %v571
        %v573 = vrot.slane %v568, %v572
        %v574 = vlaneseq
        %v575 = vshrl.u32 %v574, 7
        %v576 = vsub.s32 1, %v575
        %v577 = vrot.slane %v568, %v576
        %580 = vmatprep.subr.mxu0 %v537
        %581 = vmatpush1.msra.mxu0 %v536
        %582 = vmatprep.subr.mxu0 %v539
        %583 = vmatpush1.msra.mxu0 %v538
        %584 = vmatprep.subr.mxu0 %v541
        %585 = vmatpush1.msra.mxu0 %v540
        %586 = vmatprep.subr.mxu0 %v543
        %587 = vmatpush1.msra.mxu0 %v542
        %588 = vmatprep.subr.mxu0 %v545
        %589 = vmatpush1.msra.mxu0 %v544
        %590 = vmatprep.subr.mxu0 %v547
        %591 = vmatpush1.msra.mxu0 %v546
        %592 = vmatprep.subr.mxu0 %v549
        %593 = vmatpush1.msra.mxu0 %v548
        %594 = vmatprep.subr.mxu0 %v551
        %595 = vmatpush1.msra.mxu0 %v550
        %596 = vmatprep.subr.mxu0 %v553
        %597 = vmatpush1.msra.mxu0 %v552
        %598 = vmatprep.subr.mxu0 %v555
        %599 = vmatpush1.msra.mxu0 %v554
        %600 = vmatprep.subr.mxu0 %v557
        %601 = vmatpush1.msra.mxu0 %v556
        %602 = vmatprep.subr.mxu0 %v559
        %603 = vmatpush1.msra.mxu0 %v558
        %604 = vmatprep.subr.mxu0 %v561
        %605 = vmatpush1.msra.mxu0 %v560
        %606 = vmatprep.subr.mxu0 %v563
        %607 = vmatpush1.msra.mxu0 %v562
        %608 = vmatprep.subr.mxu0 %v565
        %609 = vmatpush1.msra.mxu0 %v564
        %610 = vmatprep.subr.mxu0 %v567
        %611 = vmatpush1.msra.mxu0 %v566
        %612 = vmatprep.subr.mxu0 0.0
        %613 = vmatpush1.msra.mxu0 0.0
        %614 = vmatprep.subr.mxu0 0.0
        %615 = vmatpush1.msra.mxu0 0.0
        %616 = vmatprep.subr.mxu0 0.0
        %617 = vmatpush1.msra.mxu0 0.0
        %618 = vmatprep.subr.mxu0 0.0
        %619 = vmatpush1.msra.mxu0 0.0
        %620 = vmatprep.subr.mxu0 0.0
        %621 = vmatpush1.msra.mxu0 0.0
        %622 = vmatprep.subr.mxu0 0.0
        %623 = vmatpush1.msra.mxu0 0.0
        %624 = vmatprep.subr.mxu0 0.0
        %625 = vmatpush1.msra.mxu0 0.0
        %626 = vmatprep.subr.mxu0 0.0
        %627 = vmatpush1.msra.mxu0 0.0
        %628 = vmatprep.subr.mxu0 0.0
        %629 = vmatpush1.msra.mxu0 0.0
        %630 = vmatprep.subr.mxu0 0.0
        %631 = vmatpush1.msra.mxu0 0.0
        %632 = vmatprep.subr.mxu0 0.0
        %633 = vmatpush1.msra.mxu0 0.0
        %634 = vmatprep.subr.mxu0 0.0
        %635 = vmatpush1.msra.mxu0 0.0
        %636 = vmatprep.subr.mxu0 0.0
        %637 = vmatpush1.msra.mxu0 0.0
        %638 = vmatprep.subr.mxu0 0.0
        %639 = vmatpush1.msra.mxu0 0.0
        %640 = vmatprep.subr.mxu0 0.0
        %641 = vmatpush1.msra.mxu0 0.0
        %642 = vmatprep.subr.mxu0 0.0
        %643 = vmatpush1.msra.mxu0 0.0
        %644 = vmatprep.mubr.f32.mxu0 0.0
        %645 = vmatmul.mubr.f32.gmra.mrb[0].mxu0 %v420
        %v646 = vpop.f32.mrb[0].mxu0
        %v647 = vadd.f32 %v573, %v646
        %v648 = vpop.f32.mrb[0].mxu0
        %v649 = vadd.f32 %v577, %v648
        %650 = vdwg.mxu0
        %v651 = vmul.f32 %v532, %v647
        %v652 = vmul.f32 %v534, %v649
        %v653 = vld [vmem:[#allocation2] sm:$0xff]
        %v654 = vld [vmem:[#allocation9] sm:$0xff]
        %v655 = vld [vmem:[#allocation9 + $0x8] sm:$0xff]
        %v656 = vld [vmem:[#allocation9 + $0x10] sm:$0xff]
        %v657 = vld [vmem:[#allocation9 + $0x18] sm:$0xff]
        %v658 = vld [vmem:[#allocation9 + $0x20] sm:$0xff]
        %v659 = vld [vmem:[#allocation9 + $0x28] sm:$0xff]
        %v660 = vld [vmem:[#allocation9 + $0x30] sm:$0xff]
        %v661 = vld [vmem:[#allocation9 + $0x38] sm:$0xff]
        %v662 = vld [vmem:[#allocation9 + $0x40] sm:$0xff]
        %v663 = vld [vmem:[#allocation9 + $0x48] sm:$0xff]
        %v664 = vld [vmem:[#allocation9 + $0x50] sm:$0xff]
        %v665 = vld [vmem:[#allocation9 + $0x58] sm:$0xff]
        %v666 = vld [vmem:[#allocation9 + $0x60] sm:$0xff]
        %v667 = vld [vmem:[#allocation9 + $0x68] sm:$0xff]
        %v668 = vld [vmem:[#allocation9 + $0x70] sm:$0xff]
        %v669 = vld [vmem:[#allocation9 + $0x78] sm:$0xff]
        %v670 = vld [vmem:[#allocation9 + $0x80] sm:$0xff]
        %v671 = vld [vmem:[#allocation9 + $0x88] sm:$0xff]
        %v672 = vld [vmem:[#allocation9 + $0x90] sm:$0xff]
        %v673 = vld [vmem:[#allocation9 + $0x98] sm:$0xff]
        %v674 = vld [vmem:[#allocation9 + $0xa0] sm:$0xff]
        %v675 = vld [vmem:[#allocation9 + $0xa8] sm:$0xff]
        %v676 = vld [vmem:[#allocation9 + $0xb0] sm:$0xff]
        %v677 = vld [vmem:[#allocation9 + $0xb8] sm:$0xff]
        %v678 = vld [vmem:[#allocation9 + $0xc0] sm:$0xff]
        %v679 = vld [vmem:[#allocation9 + $0xc8] sm:$0xff]
        %v680 = vld [vmem:[#allocation9 + $0xd0] sm:$0xff]
        %v681 = vld [vmem:[#allocation9 + $0xd8] sm:$0xff]
        %v682 = vld [vmem:[#allocation9 + $0xe0] sm:$0xff]
        %v683 = vld [vmem:[#allocation9 + $0xe8] sm:$0xff]
        %v684 = vld [vmem:[#allocation9 + $0xf0] sm:$0xff]
        %v685 = vld [vmem:[#allocation9 + $0xf8] sm:$0xff]
        %686 = vmatprep.subr.mxu0 0.0
        %687 = vmatpush1.msra.mxu0 %v654
        %688 = vmatprep.subr.mxu0 0.0
        %689 = vmatpush1.msra.mxu0 %v655
        %690 = vmatprep.subr.mxu0 0.0
        %691 = vmatpush1.msra.mxu0 %v656
        %692 = vmatprep.subr.mxu0 0.0
        %693 = vmatpush1.msra.mxu0 %v657
        %694 = vmatprep.subr.mxu0 0.0
        %695 = vmatpush1.msra.mxu0 %v658
        %696 = vmatprep.subr.mxu0 0.0
        %697 = vmatpush1.msra.mxu0 %v659
        %698 = vmatprep.subr.mxu0 0.0
        %699 = vmatpush1.msra.mxu0 %v660
        %700 = vmatprep.subr.mxu0 0.0
        %701 = vmatpush1.msra.mxu0 %v661
        %702 = vmatprep.subr.mxu0 0.0
        %703 = vmatpush1.msra.mxu0 %v662
        %704 = vmatprep.subr.mxu0 0.0
        %705 = vmatpush1.msra.mxu0 %v663
        %706 = vmatprep.subr.mxu0 0.0
        %707 = vmatpush1.msra.mxu0 %v664
        %708 = vmatprep.subr.mxu0 0.0
        %709 = vmatpush1.msra.mxu0 %v665
        %710 = vmatprep.subr.mxu0 0.0
        %711 = vmatpush1.msra.mxu0 %v666
        %712 = vmatprep.subr.mxu0 0.0
        %713 = vmatpush1.msra.mxu0 %v667
        %714 = vmatprep.subr.mxu0 0.0
        %715 = vmatpush1.msra.mxu0 %v668
        %716 = vmatprep.subr.mxu0 0.0
        %717 = vmatpush1.msra.mxu0 %v669
        %718 = vmatprep.subr.mxu0 0.0
        %719 = vmatpush1.msra.mxu0 %v670
        %720 = vmatprep.subr.mxu0 0.0
        %721 = vmatpush1.msra.mxu0 %v671
        %722 = vmatprep.subr.mxu0 0.0
        %723 = vmatpush1.msra.mxu0 %v672
        %724 = vmatprep.subr.mxu0 0.0
        %725 = vmatpush1.msra.mxu0 %v673
        %726 = vmatprep.subr.mxu0 0.0
        %727 = vmatpush1.msra.mxu0 %v674
        %728 = vmatprep.subr.mxu0 0.0
        %729 = vmatpush1.msra.mxu0 %v675
        %730 = vmatprep.subr.mxu0 0.0
        %731 = vmatpush1.msra.mxu0 %v676
        %732 = vmatprep.subr.mxu0 0.0
        %733 = vmatpush1.msra.mxu0 %v677
        %734 = vmatprep.subr.mxu0 0.0
        %735 = vmatpush1.msra.mxu0 %v678
        %736 = vmatprep.subr.mxu0 0.0
        %737 = vmatpush1.msra.mxu0 %v679
        %738 = vmatprep.subr.mxu0 0.0
        %739 = vmatpush1.msra.mxu0 %v680
        %740 = vmatprep.subr.mxu0 0.0
        %741 = vmatpush1.msra.mxu0 %v681
        %742 = vmatprep.subr.mxu0 0.0
        %743 = vmatpush1.msra.mxu0 %v682
        %744 = vmatprep.subr.mxu0 0.0
        %745 = vmatpush1.msra.mxu0 %v683
        %746 = vmatprep.subr.mxu0 0.0
        %747 = vmatpush1.msra.mxu0 %v684
        %748 = vmatprep.subr.mxu0 0.0
        %749 = vmatpush1.msra.mxu0 %v685
        %750 = vmatprep.mubr.f32.mxu0 %v652
        %751 = vmatmul.mubr.f32.gmra.mrb[0].mxu0 %v651
        %v752 = vpop.f32.mrb[0].mxu0
        %v753 = vadd.f32 0.0, %v752
        %v754 = vpop.f32.mrb[0].mxu0
        %755 = vdwg.mxu0
        %v756 = vadd.f32 %v653, %v753
        %757 = vst [vmem:[#allocation2] sm:$0xff] %v756
        // Predicated region
        $region69: #{tpu_custom_call.1} parent=47 // pred_check
          %p758 = pneg %p415
        $region70: #{tpu_custom_call.1} parent=47 // pred_check_branch
          %760 = sbr.rel (%p758) target = $region72
        $region71: #{tpu_custom_call.1} parent=47 // pred_region
          %v761 = vld [vmem:[#allocation2] sm:$0xff]
          %v762 = vld [vmem:[%s6] sm:$0x1]
          %v764 = vlaneseq
          %v765 = vshrl.u32 %v764, 7
          %v766 = vsub.s32 0, %v765
          %v767 = vrot.slane %v762, %v766
          %v769 = vadd.f32 %v761, %v767
          %770 = vst [vmem:[%s401] sm:$0xff] %v769
        $region72: #{tpu_custom_call.1} parent=47 // pred_fallthru
          _
        %s771 = sand.u32 %s223, 1
        %s772 = scalar_lea.sflag [#allocation5], %s771
        %s773 = sand.u32 %s223, 1
        %s774 = smul.addr %s773, 8
        %s775 = scalar_lea.vmem [#allocation11], %s774
        // Predicated region
        $region73: #{tpu_custom_call.1} parent=47 // pred_check
          %p776 = pneg %p233
        $region74: #{tpu_custom_call.1} parent=47 // pred_check_branch
          %778 = sbr.rel (%p776) target = $region76
        $region75: #{tpu_custom_call.1} parent=47 // pred_region
          %s780 = ssub.s32 128, 128
          %781 = vsyncadd %s772, %s780
          %s782 = smul.addr %s30, 128
          %s783 = scalar_lea.hbm %s7, %s782
          %s785 = sshll.u32 %s775, 4
          %s786 = int_to_ptr.vmem [resolvable:$true] %s785
          %788 = dma.vmem_to_hbm [thread:$0]  %s786, 128, %s783, %s772
        $region76: #{tpu_custom_call.1} parent=47 // pred_fallthru
          _
      $region48: #{tpu_custom_call.1} parent=5 // pred_fallthru
        _
      %p789 = scmp.le.s32.totalorder 2, %s21
      // Predicated region
      $region77: #{tpu_custom_call.1} parent=5 // pred_check
        %p790 = pneg %p789
      $region78: #{tpu_custom_call.1} parent=5 // pred_check_branch
        %792 = sbr.rel (%p790) target = $region80
      $region79: #{tpu_custom_call.1} parent=5 // pred_region
        %s793 = ssub.s32 %s21, 2
        // Predicated region
        $region81: #{tpu_custom_call.1} parent=79 // pred_check
          %p794 = pneg %p239
        $region82: #{tpu_custom_call.1} parent=79 // pred_check_branch
          %796 = sbr.rel (%p794) target = $region84
        $region83: #{tpu_custom_call.1} parent=79 // pred_region
          %s797 = sand.u32 %s224, 1
          %s798 = scalar_lea.sflag [#allocation5], %s797
          %s799 = sand.u32 %s224, 1
          %s800 = smul.addr %s799, 8
          %s801 = scalar_lea.vmem [#allocation11], %s800
          %802 = dma.done %s798, 128
        $region84: #{tpu_custom_call.1} parent=79 // pred_fallthru
          _
      $region80: #{tpu_custom_call.1} parent=5 // pred_fallthru
        _
    $region6: #{tpu_custom_call.1} parent=1 // loop_footer
      %s25 = sadd.s32 1, %s21
    $region7: #{tpu_custom_call.1} parent=1 // loop_footer_branch
      %20 = sbr.rel target = $region3
    $region8: #{tpu_custom_call.1} parent=1 // loop_exit
      _
    %803 = vsyncpa [#allocation4], 1
    %s804 = scalar_lea.sflag [#allocation4], 1
    %805 = vsyncpa %s804, 1
    %806 = vsyncpa [#allocation7], 1
    %807 = vsyncpa [#allocation10], 1
    %808 = vsyncpa [#allocation5], 1
    %s809 = scalar_lea.sflag [#allocation5], 1
    %810 = vsyncpa %s809, 1

</llo_original>
